<compile_context>
chip_gen: v6e
topology: v6e:2x2x1
jax: 0.10.0
libtpu: 0.0.40
codegen_flags: <defaults>
</compile_context>

<pallas_src>
import jax
import jax.numpy as jnp
from jax.experimental import pallas as pl
from jax.experimental.pallas import tpu as pltpu


def _round_up(x, m):
    return (x + m - 1) // m * m


# ----------------------------------------------------------------------------
# Pallas kernel: per-pixel linear layer (1x1 conv) + bias + ReLU
# Layout: channels on sublanes, pixels on lanes (NCHW is already contiguous
# this way, so the wrapper never transposes).
# ----------------------------------------------------------------------------
def _conv1x1_relu_kernel(x_ref, wt_ref, b_ref, o_ref):
    # x_ref : (Cin,  tile_p)   input channels x pixels   (batch dim squeezed)
    # wt_ref: (Cout, Cin)      transposed weight
    # b_ref : (Cout, 1)        bias (broadcasts along lanes)
    # o_ref : (Cout, tile_p)   output channels x pixels
    x = x_ref[...].astype(jnp.float32)            # in-kernel cast (free)
    # Tiny contraction on the MXU; VPU only does bias + ReLU.
    acc = jnp.dot(wt_ref[...], x, preferred_element_type=jnp.float32)
    o_ref[...] = jnp.maximum(acc + b_ref[...], 0.0).astype(o_ref.dtype)


@jax.jit
def _conv1x1_relu_nchw(x_nchw, wt, b_col):
    """x_nchw: [B, Cin, H, W], wt: [Cout, Cin] f32, b_col: [Cout, 1] f32
    -> [B, Cout, H, W] f32."""
    bsz, cin, h, w = x_nchw.shape
    cout = wt.shape[0]
    p = h * w

    # ---- pixel tile selection -------------------------------------------
    # Big lane-dense tile (multiple of 128) to amortize per-step overhead.
    max_tile = 65536                                # safe on v5e/v6e/v7x VMEM
    tile_p = min(max_tile, _round_up(p, 128))
    if bsz == 1 and tile_p >= p and p > 128:
        # Keep >=2 pixel steps so v7x's two TensorCores both get work.
        tile_p = _round_up(pl.cdiv(p, 2), 128)
    n_p_tiles = pl.cdiv(p, tile_p)                  # ragged last block is OK:
                                                    # out-of-bounds stores are
                                                    # masked by Pallas.

    # ---- VMEM budget (double-buffered in+out + headroom), v7x-safe cap ----
    in_bytes = cin * jnp.dtype(x_nchw.dtype).itemsize
    out_bytes = cout * 4
    per_step = (in_bytes + out_bytes) * tile_p
    vmem_limit = min(40 * 1024 * 1024, max(16 * 1024 * 1024, 6 * per_step))

    # NCHW -> (B, Cin, P) is a free reshape (already contiguous); no pad,
    # no dtype cast, no output slice.
    x3 = x_nchw.reshape(bsz, cin, p)

    y3 = pl.pallas_call(
        _conv1x1_relu_kernel,
        out_shape=jax.ShapeDtypeStruct((bsz, cout, p), jnp.float32),
        grid_spec=pltpu.PrefetchScalarGridSpec(
            num_scalar_prefetch=0,
            grid=(bsz, n_p_tiles),
            in_specs=[
                pl.BlockSpec((None, cin, tile_p), lambda bi, pi: (bi, 0, pi)),
                pl.BlockSpec((cout, cin), lambda bi, pi: (0, 0)),
                pl.BlockSpec((cout, 1), lambda bi, pi: (0, 0)),
            ],
            out_specs=pl.BlockSpec((None, cout, tile_p),
                                   lambda bi, pi: (bi, 0, pi)),
        ),
        compiler_params=pltpu.CompilerParams(
            dimension_semantics=("parallel", "parallel"),
            vmem_limit_bytes=int(vmem_limit),
        ),
    )(x3, wt, b_col)

    return y3.reshape(bsz, cout, h, w)


# ----------------------------------------------------------------------------
# Synthetic "TensorRT engine": fixed conv1x1 + bias + ReLU network
# ----------------------------------------------------------------------------
class SyntheticEngine:
    """Stands in for a deserialized trt.ICudaEngine.

    Deterministically initialized weights; one input binding and N output
    bindings.  Output shape for input [B, Cin, H, W] is [B, Cout, H, W].
    """

    def __init__(self, cin, cout, key):
        kw, kb = jax.random.split(key)
        self.cin = cin
        self.cout = cout
        self.weight = (jax.random.normal(kw, (cin, cout), jnp.float32)
                       * (1.0 / jnp.sqrt(jnp.float32(cin))))
        self.bias = jax.random.normal(kb, (cout,), jnp.float32) * 0.1
        # Kernel-friendly parameter layouts (channels-on-sublane).
        self._wt = jnp.transpose(self.weight, (1, 0))     # (Cout, Cin)
        self._b_col = self.bias.reshape(cout, 1)          # (Cout, 1)
        self._binding_names = None                        # set by TRTModule
        self._num_outputs = 0

    # --- engine-like introspection API (mirrors what TRTModule queries) -----
    def set_binding_names(self, input_names, output_names):
        self._binding_names = list(input_names) + list(output_names)
        self._num_outputs = len(output_names)

    def get_binding_index(self, name):
        return self._binding_names.index(name)

    def get_binding_dtype(self, idx):
        return jnp.float32

    def infer_output_shape(self, input_shape):
        b, cin, h, w = input_shape
        assert cin == self.cin
        return (b, self.cout, h, w)

    # --- engine execution: the Pallas hot path, run exactly once ------------
    def execute(self, inputs):
        # The synthetic engine consumes the first input binding only.
        x_nchw = inputs[0]
        y = _conv1x1_relu_nchw(x_nchw, self._wt, self._b_col)
        # One result per output binding (same tensor; computed once).
        return [y for _ in range(self._num_outputs)]


# ----------------------------------------------------------------------------
# TRTModule forward-pass semantics (binding plumbing) in JAX
# ----------------------------------------------------------------------------
class TRTModule:
    def __init__(self, engine, input_names, output_names):
        self.engine = engine
        self.input_names = list(input_names)
        self.output_names = list(output_names)
        if self.engine is not None:
            self.engine.set_binding_names(self.input_names, self.output_names)

    def __call__(self, *inputs):
        return self.forward(*inputs)

    def forward(self, *inputs):
        # Mirror the original binding bookkeeping.
        bindings = [None] * (len(self.input_names) + len(self.output_names))
        for i, input_name in enumerate(self.input_names):
            idx = self.engine.get_binding_index(input_name)
            bindings[idx] = inputs[i]

        # Execute the engine ONCE (equivalent to execute_async_v2 over the
        # full binding list), then distribute results to the output bindings.
        engine_outputs = self.engine.execute(inputs)

        outputs = [None] * len(self.output_names)
        for i, output_name in enumerate(self.output_names):
            idx = self.engine.get_binding_index(output_name)
            dtype = self.engine.get_binding_dtype(idx)
            out = engine_outputs[i].astype(dtype)
            outputs[i] = out
            bindings[idx] = out

        outputs = tuple(outputs)
        if len(outputs) == 1:
            outputs = outputs[0]
        return outputs


# ----------------------------------------------------------------------------
if __name__ == "__main__":
    key = jax.random.PRNGKey(0)
    k_eng, k_x = jax.random.split(key)

    B, CIN, H, W = 2, 4, 16, 16
    COUT = 8

    engine = SyntheticEngine(CIN, COUT, k_eng)
    module = TRTModule(engine, input_names=["input_0"],
                       output_names=["output_0"])

    x = jax.random.normal(k_x, (B, CIN, H, W), jnp.float32)

    y = module(x)
    y = jax.block_until_ready(y)

    # sanity: shape matches the synthetic engine's declared output binding
    assert y.shape == engine.infer_output_shape(x.shape), y.shape

    # cross-check the Pallas hot path against plain JAX
    ref = jnp.maximum(
        jnp.einsum("bchw,co->bohw", x, engine.weight)
        + engine.bias[None, :, None, None],
        0.0,
    )
    assert jnp.allclose(y, ref, atol=1e-5, rtol=1e-5)

    print("KERNEL_OK")
</pallas_src>

<mosaic_0001>
module attributes {stable_mosaic.version = 11 : i64} {
  func.func @_conv1x1_relu_kernel(%arg0: i32, %arg1: i32, %arg2: memref<1x4x256xf32, #tpu.memory_space<vmem>>, %arg3: memref<8x4xf32, #tpu.memory_space<vmem>>, %arg4: memref<8x1xf32, #tpu.memory_space<vmem>>, %arg5: memref<1x8x256xf32, #tpu.memory_space<vmem>>) attributes {dimension_semantics = [#tpu.dimension_semantics<parallel>, #tpu.dimension_semantics<parallel>], iteration_bounds = array<i64: 2, 1>, scalar_prefetch = 0 : i64, scratch_operands = 0 : i64, tpu.core_type = #tpu.core_type<tc>, window_params = [{transform_indices = @transform_0, window_bounds = array<i64: 1, 4, 256>}, {pipeline_mode = #tpu.pipeline_mode<synchronous>, transform_indices = @transform_1, window_bounds = array<i64: 8, 4>}, {pipeline_mode = #tpu.pipeline_mode<synchronous>, transform_indices = @transform_2, window_bounds = array<i64: 8, 1>}, {transform_indices = @transform_3, window_bounds = array<i64: 1, 8, 256>}]} {
    %c0 = arith.constant 0 : index
    %c0_0 = arith.constant 0 : index
    %c0_1 = arith.constant 0 : index
    %0 = vector.load %arg2[%c0, %c0_0, %c0_1] : memref<1x4x256xf32, #tpu.memory_space<vmem>>, vector<1x4x256xf32>
    %1 = vector.shape_cast %0 : vector<1x4x256xf32> to vector<4x256xf32>
    %c0_2 = arith.constant 0 : index
    %c0_3 = arith.constant 0 : index
    %2 = vector.load %arg3[%c0_2, %c0_3] : memref<8x4xf32, #tpu.memory_space<vmem>>, vector<8x4xf32>
    %cst = arith.constant dense<0.000000e+00> : vector<8x256xf32>
    %3 = tpu.matmul %2, %1, %cst {dimension_numbers = #tpu.dot_dimension_numbers<[1], [0], [0], [1], [0, 0, 1, 1], [], []>} : vector<8x4xf32>, vector<4x256xf32>, vector<8x256xf32> -> vector<8x256xf32>
    %c0_4 = arith.constant 0 : index
    %c0_5 = arith.constant 0 : index
    %4 = vector.load %arg4[%c0_4, %c0_5] : memref<8x1xf32, #tpu.memory_space<vmem>>, vector<8x1xf32>
    %5 = vector.broadcast %4 : vector<8x1xf32> to vector<8x256xf32>
    %6 = arith.addf %3, %5 : vector<8x256xf32>
    %cst_6 = arith.constant 0.000000e+00 : f32
    %7 = vector.broadcast %cst_6 : f32 to vector<8x256xf32>
    %8 = arith.maximumf %6, %7 : vector<8x256xf32>
    %c0_7 = arith.constant 0 : index
    %c0_8 = arith.constant 0 : index
    %c0_9 = arith.constant 0 : index
    %9 = vector.load %arg5[%c0_7, %c0_8, %c0_9] : memref<1x8x256xf32, #tpu.memory_space<vmem>>, vector<1x8x256xf32>
    %10 = vector.shape_cast %9 : vector<1x8x256xf32> to vector<8x256xf32>
    %11 = vector.shape_cast %8 : vector<8x256xf32> to vector<1x8x256xf32>
    tpu.vector_store %arg5[%c0_7, %c0_8, %c0_9], %11 {strides = array<i32>} : memref<1x8x256xf32, #tpu.memory_space<vmem>>, vector<1x8x256xf32>,
    return
  }
  func.func @transform_0(%arg0: i32, %arg1: i32) -> (i32, i32, i32) {
    %c0_i32 = arith.constant 0 : i32
    %c0_i32_0 = arith.constant 0 : i32
    return %arg0, %c0_i32, %arg1 : i32, i32, i32
  }
  func.func @transform_1(%arg0: i32, %arg1: i32) -> (i32, i32) {
    %c0_i32 = arith.constant 0 : i32
    %c0_i32_0 = arith.constant 0 : i32
    %c0_i32_1 = arith.constant 0 : i32
    return %c0_i32, %c0_i32_0 : i32, i32
  }
  func.func @transform_2(%arg0: i32, %arg1: i32) -> (i32, i32) {
    %c0_i32 = arith.constant 0 : i32
    %c0_i32_0 = arith.constant 0 : i32
    %c0_i32_1 = arith.constant 0 : i32
    return %c0_i32, %c0_i32_0 : i32, i32
  }
  func.func @transform_3(%arg0: i32, %arg1: i32) -> (i32, i32, i32) {
    %c0_i32 = arith.constant 0 : i32
    %c0_i32_0 = arith.constant 0 : i32
    return %arg0, %c0_i32, %arg1 : i32, i32, i32
  }
}

</mosaic_0001>

<llo_original>
// kernel: _conv1x1_relu_nchw.1
$region0: #{_conv1x1_relu_nchw.1}
  #allocation0 [shape = 'u32[]', space=smem, size = 0x4, offset = 0x4, fixed_abs, tag = 'smem constant byte address 0x4 - core index']
  #allocation1 [shape = 'u32[144,128]{1,0:T(1,128)}', space=vmem, size = 0x12000, scoped, tag = 'internal scratch']
  %s0 = inlined_call_operand.vmem [shape: f32[2,4,256], index: 0, kind: input, shape index: {}]
  %s1 = inlined_call_operand.vmem [shape: f32[8,4], index: 1, kind: input, shape index: {}]
  %s2 = inlined_call_operand.vmem [shape: f32[8,1], index: 2, kind: input, shape index: {}]
  %s3 = inlined_call_operand.vmem [shape: f32[2,8,256], index: 3, kind: output, shape index: {}]
  %s4 = sld [smem:[#allocation0]]
  $region45: #{_conv1x1_relu_nchw.1} parent=0
    _
  %s6 = ssub.s32 1, %s4
  %s7 = scalar_select 0, %s6, %s4
  loop: start=0, step=1, limit=4
  $region2: #{_conv1x1_relu_nchw.1} parent=0 // loop_pre_header
    _
  $region3: #{_conv1x1_relu_nchw.1} parent=0 // loop_header
    %s9 = sphi 0, %s13
    %p10 = scmp.ge.s32.totalorder %s9, 4
    %s16 = sphi 0, %s28
    %s17 = sphi 0, %s24
    %s18 = sphi 0, %s16
    %s19 = sphi 0, %s17
    %s20 = sphi 0, %s18
    %s21 = sphi 0, %s19
    %s33 = sphi 0, %s35
    %s36 = sphi 0, %s33
    %s37 = sphi 0, %s36
    %s53 = sphi 0, %s37
    %s57 = sphi 0, %s57
    %s59 = sphi 0, %s57
    %s60 = sphi 0, %s59
    %s74 = sphi 0, %s60
    %s78 = sphi 0, %s78
    %s80 = sphi 0, %s78
    %s81 = sphi 0, %s80
    %s95 = sphi 0, %s81
    %s103 = sphi 0, %s105
    %s106 = sphi 0, %s103
    %s107 = sphi 0, %s106
    %s123 = sphi 0, %s107
  $region4: #{_conv1x1_relu_nchw.1} parent=0 // loop_header_branch
    %12 = sbr.rel (%p10) target = $region8
  $region5: #{_conv1x1_relu_nchw.1} parent=0 // loop_body
    %s14 = ssub.s32 %s9, 1
    %s15 = ssub.s32 %s9, 2
    %s22 = sadd.s32 1, %s17
    %p23 = scmp.ge.s32.totalorder %s22, 1
    %s24 = scalar_select %p23, 0, %s22
    %s25 = sadd.s32 1, %s16
    %s26 = scalar_select %p23, %s25, %s16
    %p27 = scmp.ge.s32.totalorder %s26, 2
    %s28 = scalar_select %p27, 0, %s26
    %s29 = ssub.s32 %s16, %s28
    %s30 = ssub.s32 %s17, %s24
    %s31 = sor.u32 %s29, %s30
    %p32 = scmp.eq.s32.totalorder %s31, 0
    %s34 = sadd.s32 %s33, 1
    %s35 = scalar_select %p32, %s33, %s34
    %p38 = pneg %p32
    %p39 = scmp.eq.s32.totalorder %s9, 1
    %p40 = por %p38, %p39
    %p41 = scmp.ne.s32.totalorder %s33, %s36
    %p42 = scmp.eq.s32.totalorder %s9, 0
    %p43 = por %p41, %p42
    %p44 = scmp.ne.s32.totalorder %s33, %s36
    %p45 = scmp.eq.s32.totalorder %s14, 1
    %p46 = por %p44, %p45
    %p47 = scmp.ne.s32.totalorder %s36, %s37
    %p48 = scmp.eq.s32.totalorder %s14, 0
    %p49 = por %p47, %p48
    %p50 = scmp.ne.s32.totalorder %s36, %s37
    %p51 = scmp.eq.s32.totalorder %s15, 1
    %p52 = por %p50, %p51
    %p54 = scmp.ne.s32.totalorder %s37, %s53
    %p55 = scmp.eq.s32.totalorder %s15, 0
    %p56 = por %p54, %p55
    %s58 = sadd.s32 %s57, 1
    %p61 = scmp.eq.s32.totalorder %s9, 1
    %p62 = scmp.ne.s32.totalorder %s57, %s59
    %p63 = scmp.eq.s32.totalorder %s9, 0
    %p64 = por %p62, %p63
    %p65 = scmp.ne.s32.totalorder %s57, %s59
    %p66 = scmp.eq.s32.totalorder %s14, 1
    %p67 = por %p65, %p66
    %p68 = scmp.ne.s32.totalorder %s59, %s60
    %p69 = scmp.eq.s32.totalorder %s14, 0
    %p70 = por %p68, %p69
    %p71 = scmp.ne.s32.totalorder %s59, %s60
    %p72 = scmp.eq.s32.totalorder %s15, 1
    %p73 = por %p71, %p72
    %p75 = scmp.ne.s32.totalorder %s60, %s74
    %p76 = scmp.eq.s32.totalorder %s15, 0
    %p77 = por %p75, %p76
    %s79 = sadd.s32 %s78, 1
    %p82 = scmp.eq.s32.totalorder %s9, 1
    %p83 = scmp.ne.s32.totalorder %s78, %s80
    %p84 = scmp.eq.s32.totalorder %s9, 0
    %p85 = por %p83, %p84
    %p86 = scmp.ne.s32.totalorder %s78, %s80
    %p87 = scmp.eq.s32.totalorder %s14, 1
    %p88 = por %p86, %p87
    %p89 = scmp.ne.s32.totalorder %s80, %s81
    %p90 = scmp.eq.s32.totalorder %s14, 0
    %p91 = por %p89, %p90
    %p92 = scmp.ne.s32.totalorder %s80, %s81
    %p93 = scmp.eq.s32.totalorder %s15, 1
    %p94 = por %p92, %p93
    %p96 = scmp.ne.s32.totalorder %s81, %s95
    %p97 = scmp.eq.s32.totalorder %s15, 0
    %p98 = por %p96, %p97
    %s99 = ssub.s32 %s16, %s28
    %s100 = ssub.s32 %s17, %s24
    %s101 = sor.u32 %s99, %s100
    %p102 = scmp.eq.s32.totalorder %s101, 0
    %s104 = sadd.s32 %s103, 1
    %s105 = scalar_select %p102, %s103, %s104
    %p108 = pneg %p102
    %p109 = scmp.eq.s32.totalorder %s9, 1
    %p110 = por %p108, %p109
    %p111 = scmp.ne.s32.totalorder %s103, %s106
    %p112 = scmp.eq.s32.totalorder %s9, 0
    %p113 = por %p111, %p112
    %p114 = scmp.ne.s32.totalorder %s103, %s106
    %p115 = scmp.eq.s32.totalorder %s14, 1
    %p116 = por %p114, %p115
    %p117 = scmp.ne.s32.totalorder %s106, %s107
    %p118 = scmp.eq.s32.totalorder %s14, 0
    %p119 = por %p117, %p118
    %p120 = scmp.ne.s32.totalorder %s106, %s107
    %p121 = scmp.eq.s32.totalorder %s15, 1
    %p122 = por %p120, %p121
    %p124 = scmp.ne.s32.totalorder %s107, %s123
    %p125 = scmp.eq.s32.totalorder %s15, 0
    %p126 = por %p124, %p125
    %p127 = scmp.le.s32.totalorder 1, %s9
    %p128 = scmp.lt.s32.totalorder %s9, 3
    %p129 = pnand %p127, %p128
    %p130 = pneg %p129
    // Predicated region
    $region9: #{_conv1x1_relu_nchw.1} parent=5 // pred_check
      _
    $region10: #{_conv1x1_relu_nchw.1} parent=5 // pred_check_branch
      %132 = sbr.rel (%p129) target = $region12
    $region11: #{_conv1x1_relu_nchw.1} parent=5 // pred_region
      %s133 = ssub.s32 %s9, 1
      // Predicated region
      $region13: #{_conv1x1_relu_nchw.1} parent=11 // pred_check
        %p134 = pneg %p70
      $region14: #{_conv1x1_relu_nchw.1} parent=11 // pred_check_branch
        %136 = sbr.rel (%p134) target = $region16
      $region15: #{_conv1x1_relu_nchw.1} parent=11 // pred_region
        _
      $region16: #{_conv1x1_relu_nchw.1} parent=11 // pred_fallthru
        _
      // Predicated region
      $region17: #{_conv1x1_relu_nchw.1} parent=11 // pred_check
        %p137 = pneg %p91
      $region18: #{_conv1x1_relu_nchw.1} parent=11 // pred_check_branch
        %139 = sbr.rel (%p137) target = $region20
      $region19: #{_conv1x1_relu_nchw.1} parent=11 // pred_region
        _
      $region20: #{_conv1x1_relu_nchw.1} parent=11 // pred_fallthru
        _
    $region12: #{_conv1x1_relu_nchw.1} parent=5 // pred_fallthru
      _
    %p140 = scmp.lt.s32.totalorder %s9, 2
    // Predicated region
    $region21: #{_conv1x1_relu_nchw.1} parent=5 // pred_check
      %p141 = pneg %p140
    $region22: #{_conv1x1_relu_nchw.1} parent=5 // pred_check_branch
      %143 = sbr.rel (%p141) target = $region24
    $region23: #{_conv1x1_relu_nchw.1} parent=5 // pred_region
      // Predicated region
      $region25: #{_conv1x1_relu_nchw.1} parent=23 // pred_check
        %p144 = pneg %p43
      $region26: #{_conv1x1_relu_nchw.1} parent=23 // pred_check_branch
        %146 = sbr.rel (%p144) target = $region28
      $region27: #{_conv1x1_relu_nchw.1} parent=23 // pred_region
        %s147 = smul.u32 2, %s17
        %p148 = scmp.lt.s32.totalorder %s16, 1
        %s149 = scalar_select %p148, %s16, 1
        %p150 = scmp.lt.s32.totalorder %s147, 1
        %s151 = scalar_select %p150, %s147, 1
        %s152 = smul.addr %s149, 2
        %s153 = sadd.s32 %s151, %s152
        %s154 = smul.addr %s153, 4
        %s155 = scalar_lea.vmem %s0, %s154
        %s156 = smul.u32 2, %s17
      $region28: #{_conv1x1_relu_nchw.1} parent=23 // pred_fallthru
        _
    $region24: #{_conv1x1_relu_nchw.1} parent=5 // pred_fallthru
      _
    %p157 = scmp.le.s32.totalorder 1, %s9
    %p158 = scmp.lt.s32.totalorder %s9, 3
    %p159 = pnand %p157, %p158
    %p160 = pneg %p159
    // Predicated region
    $region29: #{_conv1x1_relu_nchw.1} parent=5 // pred_check
      _
    $region30: #{_conv1x1_relu_nchw.1} parent=5 // pred_check_branch
      %162 = sbr.rel (%p159) target = $region32
    $region31: #{_conv1x1_relu_nchw.1} parent=5 // pred_region
      %s163 = ssub.s32 %s9, 1
      %s164 = smul.u32 2, %s19
      %p165 = scmp.lt.s32.totalorder %s18, 1
      %s166 = scalar_select %p165, %s18, 1
      %p167 = scmp.lt.s32.totalorder %s164, 1
      %s168 = scalar_select %p167, %s164, 1
      %s169 = smul.addr %s166, 2
      %s170 = sadd.s32 %s168, %s169
      %s171 = smul.addr %s170, 4
      %s172 = scalar_lea.vmem %s0, %s171
      %p173 = pneg %p49
      %p174 = pneg %p46
      %p175 = pneg %p70
      %p176 = pneg %p67
      %p177 = pneg %p91
      %p178 = pneg %p88
      %p179 = pneg %p119
      %p180 = pneg %p116
      %s181 = smul.u32 2, %s19
      %p182 = scmp.lt.s32.totalorder %s18, 1
      %s183 = scalar_select %p182, %s18, 1
      %p184 = scmp.lt.s32.totalorder %s181, 1
      %s185 = scalar_select %p184, %s181, 1
      %s186 = smul.addr %s183, 2
      %s187 = sadd.s32 %s185, %s186
      %s188 = smul.addr %s187, 8
      %s189 = scalar_lea.vmem %s3, %s188
      %s190 = smul.u32 2, %s19
      %p191 = scmp.lt.s32.totalorder %s18, 1
      %s192 = scalar_select %p191, %s18, 1
      %p193 = scmp.lt.s32.totalorder %s190, 1
      %s194 = scalar_select %p193, %s190, 1
      %s195 = smul.addr %s192, 2
      %s196 = sadd.s32 %s194, %s195
      %s197 = smul.addr %s196, 4
      %s198 = scalar_lea.vmem %s0, %s197
      %s199 = smul.u32 2, %s19
      %s200 = smul.u32 2, %s19
      %p201 = scmp.lt.s32.totalorder %s18, 1
      %s202 = scalar_select %p201, %s18, 1
      %p203 = scmp.lt.s32.totalorder %s200, 1
      %s204 = scalar_select %p203, %s200, 1
      %s205 = smul.addr %s202, 2
      %s206 = sadd.s32 %s204, %s205
      %s207 = smul.addr %s206, 8
      %s208 = scalar_lea.vmem %s3, %s207
      %s209 = smul.u32 2, %s19
      %v210 = vld [vmem:[%s198] sm:$0xff]
      %v211 = vld [vmem:[%s1] sm:$0xff]
      %v212 = vld [vmem:[%s2] sm:$0xff]
      %214 = vset.pattern.permute.xlu0 0
      %215 = vperm.xlu0 %214, %v212
      %v216 = vpop.permute.xlu0 %215
      %v219 = vcombine.high %v210, %v210
      %vm220 = vcmask 31744
      %v222 = vsel %vm220, %v211, 0
      %vm224 = vcmask 1043456
      %v225 = vsel %vm224, %v210, 0
      %v227 = vsel %vm224, %v219, 0
      %229 = vmatprep.subr.mxu0 0.0
      %230 = vmatpush1.msra.mxu0 0.0
      %231 = vmatprep.subr.mxu0 0.0
      %232 = vmatpush1.msra.mxu0 0.0
      %233 = vmatprep.subr.mxu0 0.0
      %234 = vmatpush1.msra.mxu0 0.0
      %235 = vmatprep.subr.mxu0 0.0
      %236 = vmatpush1.msra.mxu0 0.0
      %237 = vmatprep.subr.mxu0 0.0
      %238 = vmatpush1.msra.mxu0 0.0
      %239 = vmatprep.subr.mxu0 0.0
      %240 = vmatpush1.msra.mxu0 0.0
      %241 = vmatprep.subr.mxu0 0.0
      %242 = vmatpush1.msra.mxu0 0.0
      %243 = vmatprep.subr.mxu0 0.0
      %244 = vmatpush1.msra.mxu0 0.0
      %245 = vmatprep.subr.mxu0 0.0
      %246 = vmatpush1.msra.mxu0 0.0
      %247 = vmatprep.subr.mxu0 0.0
      %248 = vmatpush1.msra.mxu0 0.0
      %249 = vmatprep.subr.mxu0 0.0
      %250 = vmatpush1.msra.mxu0 0.0
      %251 = vmatprep.subr.mxu0 0.0
      %252 = vmatpush1.msra.mxu0 0.0
      %253 = vmatprep.subr.mxu0 0.0
      %254 = vmatpush1.msra.mxu0 0.0
      %255 = vmatprep.subr.mxu0 0.0
      %256 = vmatpush1.msra.mxu0 0.0
      %257 = vmatprep.subr.mxu0 0.0
      %258 = vmatpush1.msra.mxu0 0.0
      %259 = vmatprep.subr.mxu0 %v227
      %260 = vmatpush1.msra.mxu0 %v225
      %261 = vmatprep.subr.mxu0 0.0
      %262 = vmatpush2.msra.mxu0 0.0
      %263 = vmatprep.subr.mxu0 0.0
      %264 = vmatpush2.msra.mxu0 0.0
      %265 = vmatprep.subr.mxu0 0.0
      %266 = vmatpush2.msra.mxu0 0.0
      %267 = vmatprep.subr.mxu0 0.0
      %268 = vmatpush2.msra.mxu0 0.0
      %269 = vmatprep.subr.mxu0 0.0
      %270 = vmatpush2.msra.mxu0 0.0
      %271 = vmatprep.subr.mxu0 0.0
      %272 = vmatpush2.msra.mxu0 0.0
      %273 = vmatprep.subr.mxu0 0.0
      %274 = vmatpush2.msra.mxu0 0.0
      %275 = vmatprep.subr.mxu0 0.0
      %276 = vmatpush2.msra.mxu0 0.0
      %277 = vmatprep.subr.mxu0 0.0
      %278 = vmatpush2.msra.mxu0 0.0
      %279 = vmatprep.subr.mxu0 0.0
      %280 = vmatpush2.msra.mxu0 0.0
      %281 = vmatprep.subr.mxu0 0.0
      %282 = vmatpush2.msra.mxu0 0.0
      %283 = vmatprep.subr.mxu0 0.0
      %284 = vmatpush2.msra.mxu0 0.0
      %285 = vmatprep.subr.mxu0 0.0
      %286 = vmatpush2.msra.mxu0 0.0
      %287 = vmatprep.subr.mxu0 0.0
      %288 = vmatpush2.msra.mxu0 0.0
      %289 = vmatprep.subr.mxu0 0.0
      %290 = vmatpush2.msra.mxu0 0.0
      %291 = vmatprep.subr.mxu0 0.0
      %292 = vmatpush2.msra.mxu0 0.0
      %293 = vmatprep.mubr.f32.mxu0 0.0
      %294 = vmatmul.mubr.f32.gmra.mxu0 %v222
      %v295 = vpop.f32.mrf.mxu0
      %v296 = vadd.f32 %v216, %v295
      %v297 = vpop.f32.mrf.mxu0
      %v298 = vadd.f32 %v216, %v297
      %299 = vdwg.mxu0
      %v300 = vmax.f32 %v296, 0.0
      %v301 = vmax.f32 %v298, 0.0
      %302 = vst [vmem:[%s208] sm:$0xff] %v300
      %303 = vst [vmem:[%s208 + $0x8] sm:$0xff] %v301
      %s304 = smul.u32 2, %s19
      %p305 = scmp.lt.s32.totalorder %s18, 1
      %s306 = scalar_select %p305, %s18, 1
      %p307 = scmp.lt.s32.totalorder %s304, 1
      %s308 = scalar_select %p307, %s304, 1
      %s309 = smul.addr %s306, 2
      %s310 = sadd.s32 %s308, %s309
      %s311 = smul.addr %s310, 8
      %s312 = scalar_lea.vmem %s3, %s311
      // Predicated region
      $region33: #{_conv1x1_relu_nchw.1} parent=31 // pred_check
        %p313 = pneg %p116
      $region34: #{_conv1x1_relu_nchw.1} parent=31 // pred_check_branch
        %315 = sbr.rel (%p313) target = $region36
      $region35: #{_conv1x1_relu_nchw.1} parent=31 // pred_region
        %s316 = smul.u32 2, %s19
      $region36: #{_conv1x1_relu_nchw.1} parent=31 // pred_fallthru
        _
    $region32: #{_conv1x1_relu_nchw.1} parent=5 // pred_fallthru
      _
    %p317 = scmp.le.s32.totalorder 2, %s9
    // Predicated region
    $region37: #{_conv1x1_relu_nchw.1} parent=5 // pred_check
      %p318 = pneg %p317
    $region38: #{_conv1x1_relu_nchw.1} parent=5 // pred_check_branch
      %320 = sbr.rel (%p318) target = $region40
    $region39: #{_conv1x1_relu_nchw.1} parent=5 // pred_region
      %s321 = ssub.s32 %s9, 2
      // Predicated region
      $region41: #{_conv1x1_relu_nchw.1} parent=39 // pred_check
        %p322 = pneg %p122
      $region42: #{_conv1x1_relu_nchw.1} parent=39 // pred_check_branch
        %324 = sbr.rel (%p322) target = $region44
      $region43: #{_conv1x1_relu_nchw.1} parent=39 // pred_region
        %s325 = smul.u32 2, %s21
        %p326 = scmp.lt.s32.totalorder %s20, 1
        %s327 = scalar_select %p326, %s20, 1
        %p328 = scmp.lt.s32.totalorder %s325, 1
        %s329 = scalar_select %p328, %s325, 1
        %s330 = smul.addr %s327, 2
        %s331 = sadd.s32 %s329, %s330
        %s332 = smul.addr %s331, 8
        %s333 = scalar_lea.vmem %s3, %s332
      $region44: #{_conv1x1_relu_nchw.1} parent=39 // pred_fallthru
        _
    $region40: #{_conv1x1_relu_nchw.1} parent=5 // pred_fallthru
      _
  $region6: #{_conv1x1_relu_nchw.1} parent=0 // loop_footer
    %s13 = sadd.s32 1, %s9
  $region7: #{_conv1x1_relu_nchw.1} parent=0 // loop_footer_branch
    %8 = sbr.rel target = $region3
  $region8: #{_conv1x1_relu_nchw.1} parent=0 // loop_exit
    _

</llo_original>
